<compile_context>
chip_gen: v7x
topology: tpu7x:2x2x1
jax: 0.10.0
libtpu: 0.0.40
codegen_flags: <defaults>
</compile_context>

<pallas_src>
import jax
import jax.numpy as jnp
from jax.experimental import pallas as pl
from jax.experimental.pallas import tpu as pltpu


def _round_up(x: int, m: int) -> int:
    return ((x + m - 1) // m) * m


def _vmem_capacity_bytes() -> int:
    """Per-TensorCore VMEM capacity; conservative fallback if unqueryable."""
    try:
        cap = getattr(pltpu.get_tpu_info(), "vmem_capacity_bytes", None)
        if cap:
            return int(cap)
    except Exception:
        pass
    return 64 * 1024 * 1024  # v7x has the smallest VMEM (64 MiB) -> safe default


def _pick_tile_n(n: int, c: int, itemsize: int, budget_bytes: int) -> int:
    # Per-row VMEM footprint per pipeline step:
    #   2 double-buffered input rows (native dtype) + ~2 f32 row-sized
    #   intermediates (x cast + exp(x - max)) + small per-row outputs.
    per_row = c * (2 * itemsize + 8) + 64
    tile = budget_bytes // per_row
    tile = max(8, min(int(tile), 8192, _round_up(n, 8)))
    return max(8, (tile // 8) * 8)


def _row_stats_kernel(preds_ref, logz_ref, sumx_ref):
    """One (TILE_N, C) row tile -> per-row logsumexp and sum of logits."""
    x = preds_ref[...].astype(jnp.float32)                   # (T, C)
    row_max = jnp.max(x, axis=-1, keepdims=True)              # (T, 1)
    lse = jnp.log(jnp.sum(jnp.exp(x - row_max), axis=-1, keepdims=True))
    logz_ref[...] = row_max + lse                              # (T, 1)
    sumx_ref[...] = jnp.sum(x, axis=-1, keepdims=True)         # (T, 1)


def label_smoothing_cross_entropy(preds, target, epsilon: float = 0.1,
                                  reduction: str = "mean", tile_n=None):
    """Matches LabelSmoothingCrossEntropy.forward(preds, target, reduction).

    preds : (N, C) float (any float dtype; cast to f32 per tile in the kernel)
    target: (N,)   int class indices
    """
    n, c = preds.shape

    vmem_cap = _vmem_capacity_bytes()
    vmem_limit = (vmem_cap * 3) // 4          # 48 MiB-class on v7x, 96 MiB on v5e/v6e
    if tile_n is None:
        tile_n = _pick_tile_n(n, c, preds.dtype.itemsize, (vmem_limit * 2) // 3)
    else:
        tile_n = max(8, (int(tile_n) // 8) * 8)

    grid = (pl.cdiv(n, tile_n),)

    log_z, sum_x = pl.pallas_call(
        _row_stats_kernel,
        out_shape=(jax.ShapeDtypeStruct((n, 1), jnp.float32),
                   jax.ShapeDtypeStruct((n, 1), jnp.float32)),
        grid=grid,
        in_specs=[
            # Native input dtype streamed through the pipeline (no f32 copy in HBM).
            pl.BlockSpec((tile_n, c), lambda i: (i, 0)),
        ],
        out_specs=(
            pl.BlockSpec((tile_n, 1), lambda i: (i, 0)),
            pl.BlockSpec((tile_n, 1), lambda i: (i, 0)),
        ),
        compiler_params=pltpu.CompilerParams(
            dimension_semantics=("parallel",),   # no carried state -> both TCs on v7x
            vmem_limit_bytes=int(vmem_limit),
        ),
    )(preds)

    log_z = log_z[:, 0]
    sum_x = sum_x[:, 0]

    # Target-logit gather outside the (N, C) hot loop: reads only ~N elements.
    tgt = target.astype(jnp.int32)
    tgt_logit = jnp.take_along_axis(preds, tgt[:, None], axis=1)[:, 0]
    tgt_logit = tgt_logit.astype(jnp.float32)

    loss = c * log_z - sum_x          # -sum(log_preds, -1) per row
    nll = log_z - tgt_logit           # -log_preds[i, target_i] per row
    if reduction == "mean":
        loss, nll = jnp.mean(loss), jnp.mean(nll)
    elif reduction == "sum":
        loss, nll = jnp.sum(loss), jnp.sum(nll)
    eps = jnp.float32(epsilon)
    return eps * (loss / c) + (jnp.float32(1.0) - eps) * nll


def _reference(preds, target, epsilon=0.1):
    """Pure-JAX reference mirroring the PyTorch module (reduction='mean')."""
    c = preds.shape[-1]
    log_preds = jax.nn.log_softmax(preds.astype(jnp.float32), axis=-1)
    loss = jnp.mean(-jnp.sum(log_preds, axis=-1))
    nll = jnp.mean(-jnp.take_along_axis(log_preds, target[:, None], axis=-1)[:, 0])
    return epsilon * (loss / c) + (1.0 - epsilon) * nll


if __name__ == "__main__":
    key = jax.random.PRNGKey(0)
    k1, k2, k3, k4 = jax.random.split(key, 4)

    # Small shapes consistent with the module: batch=8 rows of logits, 32 classes.
    N, C = 8, 32
    preds = jax.random.normal(k1, (N, C), dtype=jnp.float32)
    target = jax.random.randint(k2, (N,), 0, C, dtype=jnp.int32)
    result = jax.block_until_ready(
        label_smoothing_cross_entropy(preds, target, epsilon=0.1))
    ref = _reference(preds, target, epsilon=0.1)
    assert jnp.allclose(result, ref, rtol=1e-5, atol=1e-5), (result, ref)

    # Multi-tile + ragged case: N=20 with tile_n=8 -> grid of 3, ragged last
    # block handled by clipped DMAs (no wrapper-side padding of preds).
    N2, C2 = 20, 32
    preds2 = jax.random.normal(k3, (N2, C2), dtype=jnp.float32)
    target2 = jax.random.randint(k4, (N2,), 0, C2, dtype=jnp.int32)
    result2 = jax.block_until_ready(
        label_smoothing_cross_entropy(preds2, target2, epsilon=0.1, tile_n=8))
    ref2 = _reference(preds2, target2, epsilon=0.1)
    assert jnp.allclose(result2, ref2, rtol=1e-5, atol=1e-5), (result2, ref2)

    print("KERNEL_OK")
</pallas_src>

<mosaic_0001>
module attributes {stable_mosaic.version = 11 : i64} {
  func.func @_row_stats_kernel(%arg0: i32, %arg1: memref<8x32xf32, #tpu.memory_space<vmem>>, %arg2: memref<8x1xf32, #tpu.memory_space<vmem>>, %arg3: memref<8x1xf32, #tpu.memory_space<vmem>>) attributes {dimension_semantics = [#tpu.dimension_semantics<parallel>], iteration_bounds = array<i64: 1>, scalar_prefetch = 0 : i64, scratch_operands = 0 : i64, tpu.core_type = #tpu.core_type<tc>, window_params = [{transform_indices = @transform_0, window_bounds = array<i64: 8, 32>}, {transform_indices = @transform_1, window_bounds = array<i64: 8, 1>}, {transform_indices = @transform_2, window_bounds = array<i64: 8, 1>}]} {
    %c0 = arith.constant 0 : index
    %c0_0 = arith.constant 0 : index
    %0 = vector.load %arg1[%c0, %c0_0] : memref<8x32xf32, #tpu.memory_space<vmem>>, vector<8x32xf32>
    %cst = arith.constant dense<0xFF800000> : vector<8xf32>
    %1 = vector.multi_reduction <maximumf>, %0, %cst [1] : vector<8x32xf32> to vector<8xf32>
    %2 = vector.shape_cast %1 : vector<8xf32> to vector<8x1xf32>
    %3 = vector.broadcast %2 : vector<8x1xf32> to vector<8x32xf32>
    %4 = arith.subf %0, %3 : vector<8x32xf32>
    %5 = math.exp %4 : vector<8x32xf32>
    %cst_1 = arith.constant dense<0.000000e+00> : vector<8xf32>
    %6 = vector.multi_reduction <add>, %5, %cst_1 [1] : vector<8x32xf32> to vector<8xf32>
    %7 = vector.shape_cast %6 : vector<8xf32> to vector<8x1xf32>
    %8 = math.log %7 : vector<8x1xf32>
    %9 = arith.addf %2, %8 : vector<8x1xf32>
    %c0_2 = arith.constant 0 : index
    %c0_3 = arith.constant 0 : index
    %10 = vector.load %arg2[%c0_2, %c0_3] : memref<8x1xf32, #tpu.memory_space<vmem>>, vector<8x1xf32>
    tpu.vector_store %arg2[%c0_2, %c0_3], %9 {strides = array<i32>} : memref<8x1xf32, #tpu.memory_space<vmem>>, vector<8x1xf32>,
    %cst_4 = arith.constant dense<0.000000e+00> : vector<8xf32>
    %11 = vector.multi_reduction <add>, %0, %cst_4 [1] : vector<8x32xf32> to vector<8xf32>
    %12 = vector.shape_cast %11 : vector<8xf32> to vector<8x1xf32>
    %c0_5 = arith.constant 0 : index
    %c0_6 = arith.constant 0 : index
    %13 = vector.load %arg3[%c0_5, %c0_6] : memref<8x1xf32, #tpu.memory_space<vmem>>, vector<8x1xf32>
    tpu.vector_store %arg3[%c0_5, %c0_6], %12 {strides = array<i32>} : memref<8x1xf32, #tpu.memory_space<vmem>>, vector<8x1xf32>,
    return
  }
  func.func @transform_0(%arg0: i32) -> (i32, i32) {
    %c0_i32 = arith.constant 0 : i32
    %c0_i32_0 = arith.constant 0 : i32
    return %arg0, %c0_i32 : i32, i32
  }
  func.func @transform_1(%arg0: i32) -> (i32, i32) {
    %c0_i32 = arith.constant 0 : i32
    %c0_i32_0 = arith.constant 0 : i32
    return %arg0, %c0_i32 : i32, i32
  }
  func.func @transform_2(%arg0: i32) -> (i32, i32) {
    %c0_i32 = arith.constant 0 : i32
    %c0_i32_0 = arith.constant 0 : i32
    return %arg0, %c0_i32 : i32, i32
  }
}

</mosaic_0001>

<llo_original>
// kernel: tpu_custom_call.1
$region0: #{tpu_custom_call.1}
  #allocation0 [shape = 'u32[]', space=smem, size = 0x4, offset = 0x4, fixed_abs, tag = 'smem constant byte address 0x4 - core index']
  #allocation1 [shape = 'u32[144,128]{1,0:T(1,128)}', space=vmem, size = 0x12000, scoped, tag = 'internal scratch']
  %s0 = inlined_call_operand.hbm [shape: f32[8,32], index: 0, kind: input, shape index: {}]
  %s1 = inlined_call_operand.vmem [shape: f32[8,1], index: 1, kind: output, shape index: {0}]
  %s2 = inlined_call_operand.vmem [shape: f32[8,1], index: 2, kind: output, shape index: {1}]
  %3 = xla_tuple %s1, %s2
  %s4 = sld [smem:[#allocation0]]
  $region26: #{tpu_custom_call.1} parent=0
    _
  %s6 = ssub.s32 1, %s4
  %s7 = scalar_select 0, %s6, %s4
  $region1: #{tpu_custom_call.1} parent=0
    #allocation2 [shape = 'u8[4096]{0}', space=vmem, size = 0x1000, scoped, tag = 'input window, operand 0, single buffered']
    #allocation3 [shape = 's32[1]{0}', space=sflag, size = 0x4, scoped, tag = 'scoped memory for tpu_custom_call.1']
    %8 = vsyncpa [#allocation3], 0
    // Predicated region
    $region2: #{tpu_custom_call.1} parent=1 // pred_check
      _
    $region3: #{tpu_custom_call.1} parent=1 // pred_check_branch
      %10 = sbr.rel (0) target = $region5
    $region4: #{tpu_custom_call.1} parent=1 // pred_region
      %s12 = ssub.s32 128, 128
      %13 = vsyncadd [#allocation3], %s12
      %s15 = sshll.u32 [#allocation2], 4
      %s16 = int_to_ptr.vmem [resolvable:$true] %s15
      %18 = dma.hbm_to_vmem [thread:$0]  %s0, 128, %s16, [#allocation3]
    $region5: #{tpu_custom_call.1} parent=1 // pred_fallthru
      _
    // Predicated region
    $region6: #{tpu_custom_call.1} parent=1 // pred_check
      _
    $region7: #{tpu_custom_call.1} parent=1 // pred_check_branch
      %20 = sbr.rel (0) target = $region9
    $region8: #{tpu_custom_call.1} parent=1 // pred_region
      %21 = dma.done [#allocation3], 128
    $region9: #{tpu_custom_call.1} parent=1 // pred_fallthru
      _
    %v22 = vld [vmem:[#allocation2] sm:$0xff]
    %vm23 = vcmask 261120
    %v24 = vsel %vm23, %v22, -inf
    %25 = vmax.xlane.f32.xlu0 %v24
    %v26 = vpop.xlane.xlu0 %25
    %v27 = vsub.f32 %v22, %v26
    %v28 = vmul.f32 %v27, 1.442695
    %v29 = vpow.pop %v28
    %v30 = vsel %vm23, %v29, 0.0
    %31 = vadd.xlane.f32.xlu0 %v30
    %v32 = vpop.xlane.xlu0 %31
    %v33 = vlog2.pop %v32
    %v34 = vmul.f32 %v33, 0.6931472
    %v35 = vadd.f32 %v26, %v34
    %vm36 = vcmask 7168
    %37 = vst.msk [vmem:[%s1] sm:$0xff] %vm36, %v35
    %v38 = vsel %vm23, %v22, 0.0
    %39 = vadd.xlane.f32.xlu0 %v38
    %v40 = vpop.xlane.xlu0 %39
    %41 = vst.msk [vmem:[%s2] sm:$0xff] %vm36, %v40
    // Predicated region
    $region10: #{tpu_custom_call.1} parent=1 // pred_check
      _
    $region11: #{tpu_custom_call.1} parent=1 // pred_check_branch
      %43 = sbr.rel (0) target = $region13
    $region12: #{tpu_custom_call.1} parent=1 // pred_region
      _
    $region13: #{tpu_custom_call.1} parent=1 // pred_fallthru
      _
    // Predicated region
    $region14: #{tpu_custom_call.1} parent=1 // pred_check
      _
    $region15: #{tpu_custom_call.1} parent=1 // pred_check_branch
      %45 = sbr.rel (0) target = $region17
    $region16: #{tpu_custom_call.1} parent=1 // pred_region
      _
    $region17: #{tpu_custom_call.1} parent=1 // pred_fallthru
      _
    // Predicated region
    $region18: #{tpu_custom_call.1} parent=1 // pred_check
      _
    $region19: #{tpu_custom_call.1} parent=1 // pred_check_branch
      %47 = sbr.rel (0) target = $region21
    $region20: #{tpu_custom_call.1} parent=1 // pred_region
      _
    $region21: #{tpu_custom_call.1} parent=1 // pred_fallthru
      _
    // Predicated region
    $region22: #{tpu_custom_call.1} parent=1 // pred_check
      _
    $region23: #{tpu_custom_call.1} parent=1 // pred_check_branch
      %49 = sbr.rel (0) target = $region25
    $region24: #{tpu_custom_call.1} parent=1 // pred_region
      _
    $region25: #{tpu_custom_call.1} parent=1 // pred_fallthru
      _
    %50 = vsyncpa [#allocation3], 1

</llo_original>
